<compile_context>
chip_gen: v6e
topology: v6e:2x2x1
jax: 0.10.0
libtpu: 0.0.40
codegen_flags: <defaults>
</compile_context>

<pallas_src>
import functools

import jax
import jax.numpy as jnp
from jax.experimental import pallas as pl
from jax.experimental.pallas import tpu as pltpu

_LANE = 128
_SUBLANE = 8


def _round_up(x, m):
    return (x + m - 1) // m * m


def _mlp_kernel(x_ref, w1_ref, b1_ref, w2_ref, b2_ref, w3_ref, b3_ref, o_ref):
    x = x_ref[...].astype(jnp.float32)

    # Layer 1: Linear(input_dim -> hidden_pad) + ReLU.
    if x_ref.shape[1] == 1:
        # K == 1: VPU broadcast outer-product, avoids a wasted MXU issue
        # (127/128 of the contraction would be zero padding).
        h1 = x * w1_ref[0:1, :] + b1_ref[...]
    else:
        h1 = jnp.dot(x, w1_ref[...], preferred_element_type=jnp.float32) + b1_ref[...]
    h1 = jnp.maximum(h1, 0.0)

    # Layer 2: Linear(hidden_pad -> hidden_pad) + ReLU (MXU, 128-aligned).
    h2 = jnp.dot(h1, w2_ref[...], preferred_element_type=jnp.float32) + b2_ref[...]
    h2 = jnp.maximum(h2, 0.0)

    # Layer 3: Linear(hidden_pad -> out_pad), no activation. Lane-dense store.
    out = jnp.dot(h2, w3_ref[...], preferred_element_type=jnp.float32) + b3_ref[...]
    o_ref[...] = out.astype(o_ref.dtype)


@jax.jit
def mlp_forward(x, w1, b1, w2, b2, w3, b3):
    N, d_in = x.shape
    hidden = w1.shape[1]
    out_dim = w3.shape[1]

    H = _round_up(hidden, _LANE)     # 40  -> 128
    OUT = _round_up(out_dim, _LANE)  # 1   -> 128 (lane-dense output slab)

    # Zero-pad params once per call (outside the kernel, cheap XLA ops).
    b1 = b1.reshape(1, -1)
    b2 = b2.reshape(1, -1)
    b3 = b3.reshape(1, -1)
    w1p = jnp.pad(w1, ((0, 0), (0, H - hidden)))
    b1p = jnp.pad(b1, ((0, 0), (0, H - hidden)))
    w2p = jnp.pad(w2, ((0, H - hidden), (0, H - hidden)))
    b2p = jnp.pad(b2, ((0, 0), (0, H - hidden)))
    w3p = jnp.pad(w3, ((0, H - hidden), (0, OUT - out_dim)))
    b3p = jnp.pad(b3, ((0, 0), (0, OUT - out_dim)))

    # Batch tile: large enough to amortize per-step overhead, small enough to
    # stay far below v7x's 32 MiB default scoped-VMEM budget (one tiling for
    # all of v5e/v6e/v7x).
    TILE_B = min(512, _round_up(N, _SUBLANE))
    N_pad = _round_up(N, TILE_B)
    xp = jnp.pad(x, ((0, N_pad - N), (0, 0)))

    grid = (N_pad // TILE_B,)

    out_padded = pl.pallas_call(
        _mlp_kernel,
        out_shape=jax.ShapeDtypeStruct((N_pad, OUT), x.dtype),
        grid=grid,
        in_specs=[
            pl.BlockSpec((TILE_B, d_in), lambda i: (i, 0)),   # x tile (streamed)
            pl.BlockSpec((d_in, H), lambda i: (0, 0)),        # W1 (VMEM-resident)
            pl.BlockSpec((1, H), lambda i: (0, 0)),           # b1
            pl.BlockSpec((H, H), lambda i: (0, 0)),           # W2
            pl.BlockSpec((1, H), lambda i: (0, 0)),           # b2
            pl.BlockSpec((H, OUT), lambda i: (0, 0)),         # W3
            pl.BlockSpec((1, OUT), lambda i: (0, 0)),         # b3
        ],
        out_specs=pl.BlockSpec((TILE_B, OUT), lambda i: (i, 0)),
        compiler_params=pltpu.CompilerParams(
            dimension_semantics=("parallel",),  # shards grid across v7x's 2 TCs
        ),
    )(xp, w1p, b1p, w2p, b2p, w3p, b3p)

    # Strip batch and lane padding.
    return out_padded[:N, :out_dim]


def init_params(key, input_dim=1, hidden_dim=40, output_dim=1, dtype=jnp.float32):
    """Deterministic init mimicking PyTorch nn.Linear default U(-1/sqrt(fan_in), 1/sqrt(fan_in))."""
    keys = jax.random.split(key, 6)

    def linear(kw, kb, fan_in, fan_out):
        bound = 1.0 / jnp.sqrt(fan_in)
        w = jax.random.uniform(kw, (fan_in, fan_out), dtype, -bound, bound)
        b = jax.random.uniform(kb, (1, fan_out), dtype, -bound, bound)
        return w, b

    w1, b1 = linear(keys[0], keys[1], input_dim, hidden_dim)
    w2, b2 = linear(keys[2], keys[3], hidden_dim, hidden_dim)
    w3, b3 = linear(keys[4], keys[5], hidden_dim, output_dim)
    return w1, b1, w2, b2, w3, b3


def _ref_forward(x, w1, b1, w2, b2, w3, b3):
    h = jnp.maximum(x @ w1 + b1, 0.0)
    h = jnp.maximum(h @ w2 + b2, 0.0)
    return h @ w3 + b3


if __name__ == "__main__":
    key = jax.random.PRNGKey(0)
    k_params, k_x1, k_x2 = jax.random.split(key, 3)

    input_dim, hidden_dim, output_dim = 1, 40, 1
    params = init_params(k_params, input_dim, hidden_dim, output_dim)

    # Small batch (matches the original module usage).
    x_small = jax.random.normal(k_x1, (8, input_dim), jnp.float32)
    out_small = mlp_forward(x_small, *params)
    jax.block_until_ready(out_small)
    assert out_small.shape == (8, output_dim)
    assert jnp.allclose(out_small, _ref_forward(x_small, *params), atol=1e-4, rtol=1e-4)

    # Larger "many MAML tasks in one launch" batch: exercises batch padding,
    # grid > 1, and the parallel grid axis.
    x_big = jax.random.normal(k_x2, (1000, input_dim), jnp.float32)
    out_big = mlp_forward(x_big, *params)
    jax.block_until_ready(out_big)
    assert out_big.shape == (1000, output_dim)
    assert jnp.allclose(out_big, _ref_forward(x_big, *params), atol=1e-4, rtol=1e-4)

    print("KERNEL_OK")
</pallas_src>

<mosaic_0001>
module attributes {stable_mosaic.version = 11 : i64} {
  func.func @_mlp_kernel(%arg0: i32, %arg1: memref<8x1xf32, #tpu.memory_space<vmem>>, %arg2: memref<1x128xf32, #tpu.memory_space<vmem>>, %arg3: memref<1x128xf32, #tpu.memory_space<vmem>>, %arg4: memref<128x128xf32, #tpu.memory_space<vmem>>, %arg5: memref<1x128xf32, #tpu.memory_space<vmem>>, %arg6: memref<128x128xf32, #tpu.memory_space<vmem>>, %arg7: memref<1x128xf32, #tpu.memory_space<vmem>>, %arg8: memref<8x128xf32, #tpu.memory_space<vmem>>) attributes {dimension_semantics = [#tpu.dimension_semantics<parallel>], iteration_bounds = array<i64: 1>, scalar_prefetch = 0 : i64, scratch_operands = 0 : i64, tpu.core_type = #tpu.core_type<tc>, window_params = [{transform_indices = @transform_0, window_bounds = array<i64: 8, 1>}, {pipeline_mode = #tpu.pipeline_mode<synchronous>, transform_indices = @transform_1, window_bounds = array<i64: 1, 128>}, {pipeline_mode = #tpu.pipeline_mode<synchronous>, transform_indices = @transform_2, window_bounds = array<i64: 1, 128>}, {pipeline_mode = #tpu.pipeline_mode<synchronous>, transform_indices = @transform_3, window_bounds = array<i64: 128, 128>}, {pipeline_mode = #tpu.pipeline_mode<synchronous>, transform_indices = @transform_4, window_bounds = array<i64: 1, 128>}, {pipeline_mode = #tpu.pipeline_mode<synchronous>, transform_indices = @transform_5, window_bounds = array<i64: 128, 128>}, {pipeline_mode = #tpu.pipeline_mode<synchronous>, transform_indices = @transform_6, window_bounds = array<i64: 1, 128>}, {transform_indices = @transform_7, window_bounds = array<i64: 8, 128>}]} {
    %c0 = arith.constant 0 : index
    %c0_0 = arith.constant 0 : index
    %0 = vector.load %arg1[%c0, %c0_0] : memref<8x1xf32, #tpu.memory_space<vmem>>, vector<8x1xf32>
    %c0_1 = arith.constant 0 : index
    %c0_2 = arith.constant 0 : index
    %1 = vector.load %arg2[%c0_1, %c0_2] : memref<1x128xf32, #tpu.memory_space<vmem>>, vector<1x128xf32>
    %2 = vector.broadcast %0 : vector<8x1xf32> to vector<8x128xf32>
    %3 = vector.broadcast %1 : vector<1x128xf32> to vector<8x128xf32>
    %4 = arith.mulf %2, %3 : vector<8x128xf32>
    %c0_3 = arith.constant 0 : index
    %c0_4 = arith.constant 0 : index
    %5 = vector.load %arg3[%c0_3, %c0_4] : memref<1x128xf32, #tpu.memory_space<vmem>>, vector<1x128xf32>
    %6 = vector.broadcast %5 : vector<1x128xf32> to vector<8x128xf32>
    %7 = arith.addf %4, %6 : vector<8x128xf32>
    %cst = arith.constant 0.000000e+00 : f32
    %8 = vector.broadcast %cst : f32 to vector<8x128xf32>
    %9 = arith.maximumf %7, %8 : vector<8x128xf32>
    %c0_5 = arith.constant 0 : index
    %c0_6 = arith.constant 0 : index
    %10 = vector.load %arg4[%c0_5, %c0_6] : memref<128x128xf32, #tpu.memory_space<vmem>>, vector<128x128xf32>
    %cst_7 = arith.constant dense<0.000000e+00> : vector<8x128xf32>
    %11 = tpu.matmul %9, %10, %cst_7 {dimension_numbers = #tpu.dot_dimension_numbers<[1], [0], [0], [1], [0, 0, 1, 1], [], []>} : vector<8x128xf32>, vector<128x128xf32>, vector<8x128xf32> -> vector<8x128xf32>
    %c0_8 = arith.constant 0 : index
    %c0_9 = arith.constant 0 : index
    %12 = vector.load %arg5[%c0_8, %c0_9] : memref<1x128xf32, #tpu.memory_space<vmem>>, vector<1x128xf32>
    %13 = vector.broadcast %12 : vector<1x128xf32> to vector<8x128xf32>
    %14 = arith.addf %11, %13 : vector<8x128xf32>
    %cst_10 = arith.constant 0.000000e+00 : f32
    %15 = vector.broadcast %cst_10 : f32 to vector<8x128xf32>
    %16 = arith.maximumf %14, %15 : vector<8x128xf32>
    %c0_11 = arith.constant 0 : index
    %c0_12 = arith.constant 0 : index
    %17 = vector.load %arg6[%c0_11, %c0_12] : memref<128x128xf32, #tpu.memory_space<vmem>>, vector<128x128xf32>
    %cst_13 = arith.constant dense<0.000000e+00> : vector<8x128xf32>
    %18 = tpu.matmul %16, %17, %cst_13 {dimension_numbers = #tpu.dot_dimension_numbers<[1], [0], [0], [1], [0, 0, 1, 1], [], []>} : vector<8x128xf32>, vector<128x128xf32>, vector<8x128xf32> -> vector<8x128xf32>
    %c0_14 = arith.constant 0 : index
    %c0_15 = arith.constant 0 : index
    %19 = vector.load %arg7[%c0_14, %c0_15] : memref<1x128xf32, #tpu.memory_space<vmem>>, vector<1x128xf32>
    %20 = vector.broadcast %19 : vector<1x128xf32> to vector<8x128xf32>
    %21 = arith.addf %18, %20 : vector<8x128xf32>
    %c0_16 = arith.constant 0 : index
    %c0_17 = arith.constant 0 : index
    %22 = vector.load %arg8[%c0_16, %c0_17] : memref<8x128xf32, #tpu.memory_space<vmem>>, vector<8x128xf32>
    tpu.vector_store %arg8[%c0_16, %c0_17], %21 {strides = array<i32>} : memref<8x128xf32, #tpu.memory_space<vmem>>, vector<8x128xf32>,
    return
  }
  func.func @transform_0(%arg0: i32) -> (i32, i32) {
    %c0_i32 = arith.constant 0 : i32
    %c0_i32_0 = arith.constant 0 : i32
    return %arg0, %c0_i32 : i32, i32
  }
  func.func @transform_1(%arg0: i32) -> (i32, i32) {
    %c0_i32 = arith.constant 0 : i32
    %c0_i32_0 = arith.constant 0 : i32
    %c0_i32_1 = arith.constant 0 : i32
    return %c0_i32, %c0_i32_0 : i32, i32
  }
  func.func @transform_2(%arg0: i32) -> (i32, i32) {
    %c0_i32 = arith.constant 0 : i32
    %c0_i32_0 = arith.constant 0 : i32
    %c0_i32_1 = arith.constant 0 : i32
    return %c0_i32, %c0_i32_0 : i32, i32
  }
  func.func @transform_3(%arg0: i32) -> (i32, i32) {
    %c0_i32 = arith.constant 0 : i32
    %c0_i32_0 = arith.constant 0 : i32
    %c0_i32_1 = arith.constant 0 : i32
    return %c0_i32, %c0_i32_0 : i32, i32
  }
  func.func @transform_4(%arg0: i32) -> (i32, i32) {
    %c0_i32 = arith.constant 0 : i32
    %c0_i32_0 = arith.constant 0 : i32
    %c0_i32_1 = arith.constant 0 : i32
    return %c0_i32, %c0_i32_0 : i32, i32
  }
  func.func @transform_5(%arg0: i32) -> (i32, i32) {
    %c0_i32 = arith.constant 0 : i32
    %c0_i32_0 = arith.constant 0 : i32
    %c0_i32_1 = arith.constant 0 : i32
    return %c0_i32, %c0_i32_0 : i32, i32
  }
  func.func @transform_6(%arg0: i32) -> (i32, i32) {
    %c0_i32 = arith.constant 0 : i32
    %c0_i32_0 = arith.constant 0 : i32
    %c0_i32_1 = arith.constant 0 : i32
    return %c0_i32, %c0_i32_0 : i32, i32
  }
  func.func @transform_7(%arg0: i32) -> (i32, i32) {
    %c0_i32 = arith.constant 0 : i32
    %c0_i32_0 = arith.constant 0 : i32
    return %arg0, %c0_i32 : i32, i32
  }
}

</mosaic_0001>

<llo_original>
// kernel: mlp_forward.1
$region0: #{mlp_forward.1}
  #allocation0 [shape = 'u32[]', space=smem, size = 0x4, offset = 0x4, fixed_abs, tag = 'smem constant byte address 0x4 - core index']
  #allocation1 [shape = 'u32[144,128]{1,0:T(1,128)}', space=vmem, size = 0x12000, scoped, tag = 'internal scratch']
  %s0 = inlined_call_operand.vmem [shape: f32[8,1], index: 0, kind: input, shape index: {}]
  %s1 = inlined_call_operand.vmem [shape: f32[1,128], index: 1, kind: input, shape index: {}]
  %s2 = inlined_call_operand.vmem [shape: f32[1,128], index: 2, kind: input, shape index: {}]
  %s3 = inlined_call_operand.vmem [shape: f32[128,128], index: 3, kind: input, shape index: {}]
  %s4 = inlined_call_operand.vmem [shape: f32[1,128], index: 4, kind: input, shape index: {}]
  %s5 = inlined_call_operand.vmem [shape: f32[128,128], index: 5, kind: input, shape index: {}]
  %s6 = inlined_call_operand.vmem [shape: f32[1,128], index: 6, kind: input, shape index: {}]
  %s7 = inlined_call_operand.vmem [shape: f32[8,128], index: 7, kind: output, shape index: {}]
  %s8 = sld [smem:[#allocation0]]
  $region38: #{mlp_forward.1} parent=0
    _
  %s10 = ssub.s32 1, %s8
  %s11 = scalar_select 0, %s10, %s8
  // Predicated region
  $region2: #{mlp_forward.1} parent=0 // pred_check
    _
  $region3: #{mlp_forward.1} parent=0 // pred_check_branch
    %13 = sbr.rel (0) target = $region5
  $region4: #{mlp_forward.1} parent=0 // pred_region
    _
  $region5: #{mlp_forward.1} parent=0 // pred_fallthru
    _
  // Predicated region
  $region6: #{mlp_forward.1} parent=0 // pred_check
    _
  $region7: #{mlp_forward.1} parent=0 // pred_check_branch
    %15 = sbr.rel (0) target = $region9
  $region8: #{mlp_forward.1} parent=0 // pred_region
    _
  $region9: #{mlp_forward.1} parent=0 // pred_fallthru
    _
  // Predicated region
  $region10: #{mlp_forward.1} parent=0 // pred_check
    _
  $region11: #{mlp_forward.1} parent=0 // pred_check_branch
    %17 = sbr.rel (0) target = $region13
  $region12: #{mlp_forward.1} parent=0 // pred_region
    _
  $region13: #{mlp_forward.1} parent=0 // pred_fallthru
    _
  // Predicated region
  $region14: #{mlp_forward.1} parent=0 // pred_check
    _
  $region15: #{mlp_forward.1} parent=0 // pred_check_branch
    %19 = sbr.rel (0) target = $region17
  $region16: #{mlp_forward.1} parent=0 // pred_region
    _
  $region17: #{mlp_forward.1} parent=0 // pred_fallthru
    _
  // Predicated region
  $region18: #{mlp_forward.1} parent=0 // pred_check
    _
  $region19: #{mlp_forward.1} parent=0 // pred_check_branch
    %21 = sbr.rel (0) target = $region21
  $region20: #{mlp_forward.1} parent=0 // pred_region
    _
  $region21: #{mlp_forward.1} parent=0 // pred_fallthru
    _
  // Predicated region
  $region22: #{mlp_forward.1} parent=0 // pred_check
    _
  $region23: #{mlp_forward.1} parent=0 // pred_check_branch
    %23 = sbr.rel (0) target = $region25
  $region24: #{mlp_forward.1} parent=0 // pred_region
    _
  $region25: #{mlp_forward.1} parent=0 // pred_fallthru
    _
  // Predicated region
  $region26: #{mlp_forward.1} parent=0 // pred_check
    _
  $region27: #{mlp_forward.1} parent=0 // pred_check_branch
    %25 = sbr.rel (0) target = $region29
  $region28: #{mlp_forward.1} parent=0 // pred_region
    _
  $region29: #{mlp_forward.1} parent=0 // pred_fallthru
    _
  %v26 = vld [vmem:[%s0] sm:$0xff]
  %v27 = vld [vmem:[%s1] sm:$0x1]
  %29 = vset.pattern.permute.xlu0 0
  %30 = vperm.xlu0 %29, %v26
  %v31 = vpop.permute.xlu0 %30
  %v34 = vlaneseq
  %v35 = vshrl.u32 %v34, 7
  %v36 = vsub.s32 0, %v35
  %v37 = vrot.slane %v27, %v36
  %v39 = vmul.f32 %v31, %v37
  %v40 = vld [vmem:[%s2] sm:$0x1]
  %v42 = vlaneseq
  %v43 = vshrl.u32 %v42, 7
  %v44 = vsub.s32 0, %v43
  %v45 = vrot.slane %v40, %v44
  %v47 = vadd.f32 %v39, %v45
  %v48 = vmax.f32 %v47, 0.0
  %v49 = vld [vmem:[%s3] sm:$0xff]
  %v50 = vld [vmem:[%s3 + $0x8] sm:$0xff]
  %v51 = vld [vmem:[%s3 + $0x10] sm:$0xff]
  %v52 = vld [vmem:[%s3 + $0x18] sm:$0xff]
  %v53 = vld [vmem:[%s3 + $0x20] sm:$0xff]
  %v54 = vld [vmem:[%s3 + $0x28] sm:$0xff]
  %v55 = vld [vmem:[%s3 + $0x30] sm:$0xff]
  %v56 = vld [vmem:[%s3 + $0x38] sm:$0xff]
  %v57 = vld [vmem:[%s3 + $0x40] sm:$0xff]
  %v58 = vld [vmem:[%s3 + $0x48] sm:$0xff]
  %v59 = vld [vmem:[%s3 + $0x50] sm:$0xff]
  %v60 = vld [vmem:[%s3 + $0x58] sm:$0xff]
  %v61 = vld [vmem:[%s3 + $0x60] sm:$0xff]
  %v62 = vld [vmem:[%s3 + $0x68] sm:$0xff]
  %v63 = vld [vmem:[%s3 + $0x70] sm:$0xff]
  %v64 = vld [vmem:[%s3 + $0x78] sm:$0xff]
  %v65 = vld [vmem:[%s4] sm:$0x1]
  %v67 = vlaneseq
  %v68 = vshrl.u32 %v67, 7
  %v69 = vsub.s32 0, %v68
  %v70 = vrot.slane %v65, %v69
  %72 = vmatprep.subr.mxu0 0.0
  %73 = vmatpush1.msra.mxu0 %v64
  %74 = vmatprep.subr.mxu0 0.0
  %75 = vmatpush1.msra.mxu0 %v63
  %76 = vmatprep.subr.mxu0 0.0
  %77 = vmatpush1.msra.mxu0 %v62
  %78 = vmatprep.subr.mxu0 0.0
  %79 = vmatpush1.msra.mxu0 %v61
  %80 = vmatprep.subr.mxu0 0.0
  %81 = vmatpush1.msra.mxu0 %v60
  %82 = vmatprep.subr.mxu0 0.0
  %83 = vmatpush1.msra.mxu0 %v59
  %84 = vmatprep.subr.mxu0 0.0
  %85 = vmatpush1.msra.mxu0 %v58
  %86 = vmatprep.subr.mxu0 0.0
  %87 = vmatpush1.msra.mxu0 %v57
  %88 = vmatprep.subr.mxu0 0.0
  %89 = vmatpush1.msra.mxu0 %v56
  %90 = vmatprep.subr.mxu0 0.0
  %91 = vmatpush1.msra.mxu0 %v55
  %92 = vmatprep.subr.mxu0 0.0
  %93 = vmatpush1.msra.mxu0 %v54
  %94 = vmatprep.subr.mxu0 0.0
  %95 = vmatpush1.msra.mxu0 %v53
  %96 = vmatprep.subr.mxu0 0.0
  %97 = vmatpush1.msra.mxu0 %v52
  %98 = vmatprep.subr.mxu0 0.0
  %99 = vmatpush1.msra.mxu0 %v51
  %100 = vmatprep.subr.mxu0 0.0
  %101 = vmatpush1.msra.mxu0 %v50
  %102 = vmatprep.subr.mxu0 0.0
  %103 = vmatpush1.msra.mxu0 %v49
  %104 = vmatprep.subr.mxu0 0.0
  %105 = vmatpush2.msra.mxu0 0.0
  %106 = vmatprep.subr.mxu0 0.0
  %107 = vmatpush2.msra.mxu0 0.0
  %108 = vmatprep.subr.mxu0 0.0
  %109 = vmatpush2.msra.mxu0 0.0
  %110 = vmatprep.subr.mxu0 0.0
  %111 = vmatpush2.msra.mxu0 0.0
  %112 = vmatprep.subr.mxu0 0.0
  %113 = vmatpush2.msra.mxu0 0.0
  %114 = vmatprep.subr.mxu0 0.0
  %115 = vmatpush2.msra.mxu0 0.0
  %116 = vmatprep.subr.mxu0 0.0
  %117 = vmatpush2.msra.mxu0 0.0
  %118 = vmatprep.subr.mxu0 0.0
  %119 = vmatpush2.msra.mxu0 0.0
  %120 = vmatprep.subr.mxu0 0.0
  %121 = vmatpush2.msra.mxu0 0.0
  %122 = vmatprep.subr.mxu0 0.0
  %123 = vmatpush2.msra.mxu0 0.0
  %124 = vmatprep.subr.mxu0 0.0
  %125 = vmatpush2.msra.mxu0 0.0
  %126 = vmatprep.subr.mxu0 0.0
  %127 = vmatpush2.msra.mxu0 0.0
  %128 = vmatprep.subr.mxu0 0.0
  %129 = vmatpush2.msra.mxu0 0.0
  %130 = vmatprep.subr.mxu0 0.0
  %131 = vmatpush2.msra.mxu0 0.0
  %132 = vmatprep.subr.mxu0 0.0
  %133 = vmatpush2.msra.mxu0 0.0
  %134 = vmatprep.subr.mxu0 0.0
  %135 = vmatpush2.msra.mxu0 0.0
  %136 = vmatprep.mubr.f32.mxu0 0.0
  %137 = vmatmul.mubr.f32.gmra.mxu0 %v48
  %v138 = vpop.f32.mrf.mxu0
  %v139 = vadd.f32 %v70, %v138
  %v140 = vpop.f32.mrf.mxu0
  %141 = vdwg.mxu0
  %v142 = vmax.f32 %v139, 0.0
  %v143 = vld [vmem:[%s5] sm:$0xff]
  %v144 = vld [vmem:[%s5 + $0x8] sm:$0xff]
  %v145 = vld [vmem:[%s5 + $0x10] sm:$0xff]
  %v146 = vld [vmem:[%s5 + $0x18] sm:$0xff]
  %v147 = vld [vmem:[%s5 + $0x20] sm:$0xff]
  %v148 = vld [vmem:[%s5 + $0x28] sm:$0xff]
  %v149 = vld [vmem:[%s5 + $0x30] sm:$0xff]
  %v150 = vld [vmem:[%s5 + $0x38] sm:$0xff]
  %v151 = vld [vmem:[%s5 + $0x40] sm:$0xff]
  %v152 = vld [vmem:[%s5 + $0x48] sm:$0xff]
  %v153 = vld [vmem:[%s5 + $0x50] sm:$0xff]
  %v154 = vld [vmem:[%s5 + $0x58] sm:$0xff]
  %v155 = vld [vmem:[%s5 + $0x60] sm:$0xff]
  %v156 = vld [vmem:[%s5 + $0x68] sm:$0xff]
  %v157 = vld [vmem:[%s5 + $0x70] sm:$0xff]
  %v158 = vld [vmem:[%s5 + $0x78] sm:$0xff]
  %v159 = vld [vmem:[%s6] sm:$0x1]
  %v161 = vlaneseq
  %v162 = vshrl.u32 %v161, 7
  %v163 = vsub.s32 0, %v162
  %v164 = vrot.slane %v159, %v163
  %166 = vmatprep.subr.mxu0 0.0
  %167 = vmatpush1.msra.mxu0 %v158
  %168 = vmatprep.subr.mxu0 0.0
  %169 = vmatpush1.msra.mxu0 %v157
  %170 = vmatprep.subr.mxu0 0.0
  %171 = vmatpush1.msra.mxu0 %v156
  %172 = vmatprep.subr.mxu0 0.0
  %173 = vmatpush1.msra.mxu0 %v155
  %174 = vmatprep.subr.mxu0 0.0
  %175 = vmatpush1.msra.mxu0 %v154
  %176 = vmatprep.subr.mxu0 0.0
  %177 = vmatpush1.msra.mxu0 %v153
  %178 = vmatprep.subr.mxu0 0.0
  %179 = vmatpush1.msra.mxu0 %v152
  %180 = vmatprep.subr.mxu0 0.0
  %181 = vmatpush1.msra.mxu0 %v151
  %182 = vmatprep.subr.mxu0 0.0
  %183 = vmatpush1.msra.mxu0 %v150
  %184 = vmatprep.subr.mxu0 0.0
  %185 = vmatpush1.msra.mxu0 %v149
  %186 = vmatprep.subr.mxu0 0.0
  %187 = vmatpush1.msra.mxu0 %v148
  %188 = vmatprep.subr.mxu0 0.0
  %189 = vmatpush1.msra.mxu0 %v147
  %190 = vmatprep.subr.mxu0 0.0
  %191 = vmatpush1.msra.mxu0 %v146
  %192 = vmatprep.subr.mxu0 0.0
  %193 = vmatpush1.msra.mxu0 %v145
  %194 = vmatprep.subr.mxu0 0.0
  %195 = vmatpush1.msra.mxu0 %v144
  %196 = vmatprep.subr.mxu0 0.0
  %197 = vmatpush1.msra.mxu0 %v143
  %198 = vmatprep.subr.mxu0 0.0
  %199 = vmatpush2.msra.mxu0 0.0
  %200 = vmatprep.subr.mxu0 0.0
  %201 = vmatpush2.msra.mxu0 0.0
  %202 = vmatprep.subr.mxu0 0.0
  %203 = vmatpush2.msra.mxu0 0.0
  %204 = vmatprep.subr.mxu0 0.0
  %205 = vmatpush2.msra.mxu0 0.0
  %206 = vmatprep.subr.mxu0 0.0
  %207 = vmatpush2.msra.mxu0 0.0
  %208 = vmatprep.subr.mxu0 0.0
  %209 = vmatpush2.msra.mxu0 0.0
  %210 = vmatprep.subr.mxu0 0.0
  %211 = vmatpush2.msra.mxu0 0.0
  %212 = vmatprep.subr.mxu0 0.0
  %213 = vmatpush2.msra.mxu0 0.0
  %214 = vmatprep.subr.mxu0 0.0
  %215 = vmatpush2.msra.mxu0 0.0
  %216 = vmatprep.subr.mxu0 0.0
  %217 = vmatpush2.msra.mxu0 0.0
  %218 = vmatprep.subr.mxu0 0.0
  %219 = vmatpush2.msra.mxu0 0.0
  %220 = vmatprep.subr.mxu0 0.0
  %221 = vmatpush2.msra.mxu0 0.0
  %222 = vmatprep.subr.mxu0 0.0
  %223 = vmatpush2.msra.mxu0 0.0
  %224 = vmatprep.subr.mxu0 0.0
  %225 = vmatpush2.msra.mxu0 0.0
  %226 = vmatprep.subr.mxu0 0.0
  %227 = vmatpush2.msra.mxu0 0.0
  %228 = vmatprep.subr.mxu0 0.0
  %229 = vmatpush2.msra.mxu0 0.0
  %230 = vmatprep.mubr.f32.mxu0 0.0
  %231 = vmatmul.mubr.f32.gmra.mxu0 %v142
  %v232 = vpop.f32.mrf.mxu0
  %v233 = vadd.f32 %v164, %v232
  %v234 = vpop.f32.mrf.mxu0
  %235 = vdwg.mxu0
  %236 = vst [vmem:[%s7] sm:$0xff] %v233
  // Predicated region
  $region30: #{mlp_forward.1} parent=0 // pred_check
    _
  $region31: #{mlp_forward.1} parent=0 // pred_check_branch
    %238 = sbr.rel (0) target = $region33
  $region32: #{mlp_forward.1} parent=0 // pred_region
    _
  $region33: #{mlp_forward.1} parent=0 // pred_fallthru
    _
  // Predicated region
  $region34: #{mlp_forward.1} parent=0 // pred_check
    _
  $region35: #{mlp_forward.1} parent=0 // pred_check_branch
    %240 = sbr.rel (0) target = $region37
  $region36: #{mlp_forward.1} parent=0 // pred_region
    _
  $region37: #{mlp_forward.1} parent=0 // pred_fallthru
    _

</llo_original>
